<compile_context>
chip_gen: v5e
topology: v5e:2x2
jax: 0.10.0
libtpu: 0.0.40
codegen_flags: <defaults>
</compile_context>

<pallas_src>
import functools
import math

import jax
import jax.numpy as jnp
import numpy as np
from jax.experimental import pallas as pl
from jax.experimental.pallas import tpu as pltpu


def _round_up(x, m):
    return (x + m - 1) // m * m


def _vmem_capacity_bytes():
    try:
        return int(pltpu.get_tpu_info().vmem_capacity_bytes)
    except Exception:
        return 64 * 1024 * 1024  # conservative (v7x-sized) fallback


# -----------------------------------------------------------------------------
# Fused (im2col-patches @ folded-weight) + shift [+ relu] Pallas kernel
# -----------------------------------------------------------------------------
def _fused_mm_kernel(a_ref, b_ref, t_ref, o_ref, acc_ref, *, relu):
    @pl.when(pl.program_id(2) == 0)
    def _init():
        acc_ref[...] = jnp.zeros_like(acc_ref)

    acc_ref[...] += jnp.dot(a_ref[...], b_ref[...],
                            preferred_element_type=jnp.float32)

    @pl.when(pl.program_id(2) == pl.num_programs(2) - 1)
    def _finalize():
        # BN scale is folded into the bf16 weights at init time; only the
        # per-channel shift (+ optional ReLU) remains in the epilogue.
        y = acc_ref[...] + t_ref[...]
        if relu:
            y = jnp.maximum(y, 0.0)
        o_ref[...] = y.astype(o_ref.dtype)


def _fused_matmul(a_bf16, w_bf16, shift, *, relu, out_dtype):
    """(M, K) bf16 @ (K, Np) bf16 with fused shift/relu epilogue.

    w_bf16 / shift are pre-padded on the output-channel axis only (Np multiple
    of 128).  Returns a lane-dense (M, Np) slab in `out_dtype`.
    """
    M, K = a_bf16.shape
    Kw, Np = w_bf16.shape
    assert Kw == K and Np % 128 == 0

    vmem = _vmem_capacity_bytes()
    # Collapse the reduction grid axis whenever K fits comfortably in VMEM
    # (removes per-k-step DMA/launch overhead and init/finalize churn).
    k_collapse = 4096 if vmem >= 100 * 1024 * 1024 else 2048

    TN = 256 if Np % 256 == 0 else 128
    TM = min(512, _round_up(max(M, 1), 16))

    if K <= k_collapse:
        TK = K                      # block dim == full array dim -> no K pad
    else:
        # Rare large-K path: pad K to a lane multiple and pick the largest
        # well-aligned divisor instead of falling back to 128.
        Kp = _round_up(K, 128)
        TK = next(t for t in (2048, 1024, 512, 256, 128)
                  if Kp % t == 0 and t <= k_collapse)
        a_bf16 = jnp.pad(a_bf16, ((0, 0), (0, Kp - K)))
        w_bf16 = jnp.pad(w_bf16, ((0, Kp - K), (0, 0)))
        K = Kp

    n_n = Np // TN
    n_m = pl.cdiv(M, TM)
    # Guarantee >= 2 blocks across the parallel axes so both TensorCores on
    # v7x have work (harmless extra grid step on single-TC chips).
    while n_m * n_n < 2 and TM % 32 == 0 and TM > 16:
        TM //= 2
        n_m = pl.cdiv(M, TM)
    n_k = K // TK

    out_bytes = int(M) * int(Np) * np.dtype(out_dtype).itemsize
    cost = pl.CostEstimate(
        flops=2 * int(M) * int(K) * int(Np),
        transcendentals=0,
        bytes_accessed=int(M) * int(K) * 2 + int(K) * int(Np) * 2
                       + int(Np) * 4 + out_bytes)

    return pl.pallas_call(
        functools.partial(_fused_mm_kernel, relu=relu),
        out_shape=jax.ShapeDtypeStruct((M, Np), out_dtype),
        grid=(n_m, n_n, n_k),
        in_specs=[
            pl.BlockSpec((TM, TK), lambda i, j, k: (i, k)),
            pl.BlockSpec((TK, TN), lambda i, j, k: (k, j)),
            pl.BlockSpec((1, TN), lambda i, j, k: (0, j)),
        ],
        out_specs=pl.BlockSpec((TM, TN), lambda i, j, k: (i, j)),
        scratch_shapes=[pltpu.VMEM((TM, TN), jnp.float32)],
        compiler_params=pltpu.CompilerParams(
            dimension_semantics=("parallel", "parallel", "arbitrary"),
            vmem_limit_bytes=32 * 1024 * 1024),
        cost_estimate=cost,
    )(a_bf16, w_bf16, shift)


# -----------------------------------------------------------------------------
# Channels-last im2col (Cin innermost => lane dimension of the A-matrix)
# -----------------------------------------------------------------------------
def _im2col_nhwc(x_nhwc, kh, kw, stride, padding, dilation):
    B, H, W, Cin = x_nhwc.shape
    if padding > 0:
        x_nhwc = jnp.pad(
            x_nhwc, ((0, 0), (padding, padding), (padding, padding), (0, 0)))
    Hp, Wp = x_nhwc.shape[1], x_nhwc.shape[2]
    Ho = (Hp - dilation * (kh - 1) - 1) // stride + 1
    Wo = (Wp - dilation * (kw - 1) - 1) // stride + 1
    cols = []
    for i in range(kh):
        for j in range(kw):
            hi, wi = i * dilation, j * dilation
            cols.append(
                x_nhwc[:, hi:hi + (Ho - 1) * stride + 1:stride,
                          wi:wi + (Wo - 1) * stride + 1:stride, :])
    patches = jnp.stack(cols, axis=3)                 # (B, Ho, Wo, kh*kw, Cin)
    return patches.reshape(B * Ho * Wo, kh * kw * Cin), Ho, Wo


def _conv_core_nhwc(x_nhwc_bf16, w_bf16, shift, *, cout, kh, kw, stride,
                    padding, dilation, relu, out_dtype):
    B = x_nhwc_bf16.shape[0]
    patches, Ho, Wo = _im2col_nhwc(x_nhwc_bf16, kh, kw, stride, padding,
                                   dilation)
    out = _fused_matmul(patches, w_bf16, shift, relu=relu, out_dtype=out_dtype)
    return out[:, :cout].reshape(B, Ho, Wo, cout)


# -----------------------------------------------------------------------------
# Forward entry points
# -----------------------------------------------------------------------------
@functools.partial(jax.jit,
                   static_argnames=("cout", "kh", "kw", "stride", "padding",
                                    "dilation", "relu"))
def basic_conv_forward(x, w_bf16, shift, *, cout, kh, kw, stride, padding,
                       dilation, relu):
    """Module-compatible entry: x (B, Cin, H, W) f32 -> (B, Cout, Ho, Wo) f32."""
    x_nhwc = jnp.transpose(x, (0, 2, 3, 1)).astype(jnp.bfloat16)
    y = _conv_core_nhwc(x_nhwc, w_bf16, shift, cout=cout, kh=kh, kw=kw,
                        stride=stride, padding=padding, dilation=dilation,
                        relu=relu, out_dtype=jnp.float32)
    return jnp.transpose(y, (0, 3, 1, 2))


@functools.partial(jax.jit,
                   static_argnames=("cout", "kh", "kw", "stride", "padding",
                                    "dilation", "relu"))
def basic_conv_forward_nhwc(x_nhwc, w_bf16, shift, *, cout, kh, kw, stride,
                            padding, dilation, relu):
    """Chained-layer entry: NHWC in, NHWC bf16 out (no per-layer transposes)."""
    return _conv_core_nhwc(x_nhwc.astype(jnp.bfloat16), w_bf16, shift,
                           cout=cout, kh=kh, kw=kw, stride=stride,
                           padding=padding, dilation=dilation, relu=relu,
                           out_dtype=jnp.bfloat16)


def basic_conv_apply(params, x):
    m = params["meta"]
    return basic_conv_forward(
        x, params["w_pad"], params["shift_pad"],
        cout=m["cout"], kh=m["kh"], kw=m["kw"], stride=m["stride"],
        padding=m["padding"], dilation=m["dilation"], relu=m["relu"])


def basic_conv_apply_nhwc(params, x_nhwc):
    m = params["meta"]
    return basic_conv_forward_nhwc(
        x_nhwc, params["w_pad"], params["shift_pad"],
        cout=m["cout"], kh=m["kh"], kw=m["kw"], stride=m["stride"],
        padding=m["padding"], dilation=m["dilation"], relu=m["relu"])


# -----------------------------------------------------------------------------
# Parameter construction + one-time BN folding / weight layout (hoisted)
# -----------------------------------------------------------------------------
def init_basic_conv(key, in_planes, out_planes, kernel_size, *, stride=1,
                    padding=0, dilation=1, groups=1, relu=True, bn=True,
                    bias=False, eps=1e-5):
    if groups != 1:
        # TODO(synk): grouped convolution not lowered (BasicConv default is groups=1).
        raise NotImplementedError("groups > 1 not supported")
    k0, k1, k2, k3, k4, k5 = jax.random.split(key, 6)
    kh = kw = kernel_size
    fan_in = in_planes * kh * kw
    w = jax.random.normal(k0, (out_planes, in_planes, kh, kw),
                          jnp.float32) / math.sqrt(fan_in)
    b = (0.02 * jax.random.normal(k1, (out_planes,), jnp.float32)
         if bias else jnp.zeros((out_planes,), jnp.float32))

    if bn:  # eval-mode BatchNorm folded to per-channel scale/shift
        gamma = 1.0 + 0.1 * jax.random.normal(k2, (out_planes,), jnp.float32)
        beta = 0.05 * jax.random.normal(k3, (out_planes,), jnp.float32)
        mean = 0.05 * jax.random.normal(k4, (out_planes,), jnp.float32)
        var = 0.5 + jax.random.uniform(k5, (out_planes,), jnp.float32)
        scale = gamma / jnp.sqrt(var + eps)
        shift = beta + (b - mean) * scale
        bn_raw = dict(gamma=gamma, beta=beta, mean=mean, var=var, eps=eps)
    else:
        scale = jnp.ones((out_planes,), jnp.float32)
        shift = b
        bn_raw = None

    # Fold the BN scale into the weights in f32 (before the bf16 cast), flatten
    # the K axis as (kh, kw, Cin) to match the NHWC im2col, and pad ONLY the
    # output-channel axis for lane density.  All done once here.
    K = kh * kw * in_planes
    Np = _round_up(out_planes, 128)
    w_folded = w * scale[:, None, None, None]
    w_mat = w_folded.transpose(2, 3, 1, 0).reshape(K, out_planes)
    w_pad = jnp.pad(w_mat, ((0, 0), (0, Np - out_planes))).astype(jnp.bfloat16)
    shift_pad = jnp.pad(shift, (0, Np - out_planes)).reshape(1, Np).astype(
        jnp.float32)

    return dict(
        w_pad=w_pad, shift_pad=shift_pad,
        meta=dict(cout=out_planes, kh=kh, kw=kw, stride=stride,
                  padding=padding, dilation=dilation, relu=relu),
        raw=dict(w=w, b=(b if bias else None), bn=bn_raw))


# -----------------------------------------------------------------------------
# Pure-JAX f32 reference (for correctness validation)
# -----------------------------------------------------------------------------
def basic_conv_reference(params, x):
    raw, m = params["raw"], params["meta"]
    y = jax.lax.conv_general_dilated(
        x, raw["w"], window_strides=(m["stride"], m["stride"]),
        padding=[(m["padding"], m["padding"])] * 2,
        rhs_dilation=(m["dilation"], m["dilation"]),
        dimension_numbers=("NCHW", "OIHW", "NCHW"),
        precision=jax.lax.Precision.HIGHEST)
    if raw["b"] is not None:
        y = y + raw["b"][None, :, None, None]
    if raw["bn"] is not None:
        bn = raw["bn"]
        y = ((y - bn["mean"][None, :, None, None])
             / jnp.sqrt(bn["var"][None, :, None, None] + bn["eps"])
             * bn["gamma"][None, :, None, None] + bn["beta"][None, :, None, None])
    if m["relu"]:
        y = jnp.maximum(y, 0.0)
    return y


# -----------------------------------------------------------------------------
if __name__ == "__main__":
    key = jax.random.PRNGKey(0)
    kx, kp1, kp2, kp3 = jax.random.split(key, 4)
    x = jax.random.normal(kx, (2, 4, 16, 16), jnp.float32)

    configs = [
        dict(in_planes=4, out_planes=8, kernel_size=3, stride=1, padding=1,
             dilation=1, relu=True, bn=True, bias=False),
        dict(in_planes=4, out_planes=6, kernel_size=3, stride=2, padding=2,
             dilation=2, relu=False, bn=True, bias=False),
        dict(in_planes=4, out_planes=5, kernel_size=1, stride=1, padding=0,
             dilation=1, relu=True, bn=False, bias=True),
    ]
    for pkey, cfg in zip((kp1, kp2, kp3), configs):
        params = init_basic_conv(pkey, **cfg)
        out = jax.block_until_ready(basic_conv_apply(params, x))
        ref = basic_conv_reference(params, x)
        assert out.shape == ref.shape, (out.shape, ref.shape)
        assert bool(jnp.all(jnp.isfinite(out)))
        np.testing.assert_allclose(np.asarray(out), np.asarray(ref),
                                   rtol=5e-2, atol=5e-2)

    # Exercise the NHWC/bf16 chaining entry point (shape + finiteness only).
    params0 = init_basic_conv(kp1, **configs[0])
    x_nhwc = jnp.transpose(x, (0, 2, 3, 1))
    out_nhwc = jax.block_until_ready(basic_conv_apply_nhwc(params0, x_nhwc))
    assert out_nhwc.shape == (2, 16, 16, 8) and out_nhwc.dtype == jnp.bfloat16
    assert bool(jnp.all(jnp.isfinite(out_nhwc.astype(jnp.float32))))

    print("KERNEL_OK")
</pallas_src>

<mosaic_0001>
module attributes {stable_mosaic.version = 11 : i64} {
  func.func @_fused_mm_kernel(%arg0: i32, %arg1: i32, %arg2: i32, %arg3: memref<256x36xbf16, #tpu.memory_space<vmem>>, %arg4: memref<36x128xbf16, #tpu.memory_space<vmem>>, %arg5: memref<1x128xf32, #tpu.memory_space<vmem>>, %arg6: memref<256x128xf32, #tpu.memory_space<vmem>>, %arg7: memref<256x128xf32, #tpu.memory_space<vmem>>) attributes {dimension_semantics = [#tpu.dimension_semantics<parallel>, #tpu.dimension_semantics<parallel>, #tpu.dimension_semantics<arbitrary>], iteration_bounds = array<i64: 2, 1, 1>, scalar_prefetch = 0 : i64, scratch_operands = 1 : i64, tpu.core_type = #tpu.core_type<tc>, window_params = [{transform_indices = @transform_0, window_bounds = array<i64: 256, 36>}, {transform_indices = @transform_1, window_bounds = array<i64: 36, 128>}, {transform_indices = @transform_2, window_bounds = array<i64: 1, 128>}, {transform_indices = @transform_3, window_bounds = array<i64: 256, 128>}]} {
    %c0_i32 = arith.constant 0 : i32
    %0 = arith.cmpi eq, %arg2, %c0_i32 : i32
    %1 = arith.extui %0 : i1 to i32
    %c0_i32_0 = arith.constant 0 : i32
    %2 = arith.cmpi ne, %1, %c0_i32_0 : i32
    scf.if %2 {
      %cst_10 = arith.constant 0.000000e+00 : f32
      %12 = vector.broadcast %cst_10 : f32 to vector<256x128xf32>
      %c0_11 = arith.constant 0 : index
      %c0_12 = arith.constant 0 : index
      %13 = vector.load %arg7[%c0_11, %c0_12] : memref<256x128xf32, #tpu.memory_space<vmem>>, vector<256x128xf32>
      tpu.vector_store %arg7[%c0_11, %c0_12], %12 {strides = array<i32>} : memref<256x128xf32, #tpu.memory_space<vmem>>, vector<256x128xf32>,
    } else {
    }
    %c0 = arith.constant 0 : index
    %c0_1 = arith.constant 0 : index
    %3 = vector.load %arg7[%c0, %c0_1] : memref<256x128xf32, #tpu.memory_space<vmem>>, vector<256x128xf32>
    %c0_2 = arith.constant 0 : index
    %c0_3 = arith.constant 0 : index
    %4 = vector.load %arg3[%c0_2, %c0_3] : memref<256x36xbf16, #tpu.memory_space<vmem>>, vector<256x36xbf16>
    %c0_4 = arith.constant 0 : index
    %c0_5 = arith.constant 0 : index
    %5 = vector.load %arg4[%c0_4, %c0_5] : memref<36x128xbf16, #tpu.memory_space<vmem>>, vector<36x128xbf16>
    %cst = arith.constant dense<0.000000e+00> : vector<256x128xf32>
    %6 = tpu.matmul %4, %5, %cst {dimension_numbers = #tpu.dot_dimension_numbers<[1], [0], [0], [1], [0, 0, 1, 1], [], []>} : vector<256x36xbf16>, vector<36x128xbf16>, vector<256x128xf32> -> vector<256x128xf32>
    %7 = arith.addf %3, %6 : vector<256x128xf32>
    %c0_6 = arith.constant 0 : index
    %c0_7 = arith.constant 0 : index
    %8 = vector.load %arg7[%c0_6, %c0_7] : memref<256x128xf32, #tpu.memory_space<vmem>>, vector<256x128xf32>
    tpu.vector_store %arg7[%c0_6, %c0_7], %7 {strides = array<i32>} : memref<256x128xf32, #tpu.memory_space<vmem>>, vector<256x128xf32>,
    %c0_i32_8 = arith.constant 0 : i32
    %9 = arith.cmpi eq, %arg2, %c0_i32_8 : i32
    %10 = arith.extui %9 : i1 to i32
    %c0_i32_9 = arith.constant 0 : i32
    %11 = arith.cmpi ne, %10, %c0_i32_9 : i32
    scf.if %11 {
      %c0_10 = arith.constant 0 : index
      %c0_11 = arith.constant 0 : index
      %12 = vector.load %arg7[%c0_10, %c0_11] : memref<256x128xf32, #tpu.memory_space<vmem>>, vector<256x128xf32>
      %c0_12 = arith.constant 0 : index
      %c0_13 = arith.constant 0 : index
      %13 = vector.load %arg5[%c0_12, %c0_13] : memref<1x128xf32, #tpu.memory_space<vmem>>, vector<1x128xf32>
      %14 = vector.broadcast %13 : vector<1x128xf32> to vector<256x128xf32>
      %15 = arith.addf %12, %14 : vector<256x128xf32>
      %cst_14 = arith.constant 0.000000e+00 : f32
      %16 = vector.broadcast %cst_14 : f32 to vector<256x128xf32>
      %17 = arith.maximumf %15, %16 : vector<256x128xf32>
      %c0_15 = arith.constant 0 : index
      %c0_16 = arith.constant 0 : index
      %18 = vector.load %arg6[%c0_15, %c0_16] : memref<256x128xf32, #tpu.memory_space<vmem>>, vector<256x128xf32>
      tpu.vector_store %arg6[%c0_15, %c0_16], %17 {strides = array<i32>} : memref<256x128xf32, #tpu.memory_space<vmem>>, vector<256x128xf32>,
    } else {
    }
    return
  }
  func.func @transform_0(%arg0: i32, %arg1: i32, %arg2: i32) -> (i32, i32) {
    %c0_i32 = arith.constant 0 : i32
    return %arg0, %arg2 : i32, i32
  }
  func.func @transform_1(%arg0: i32, %arg1: i32, %arg2: i32) -> (i32, i32) {
    %c0_i32 = arith.constant 0 : i32
    return %arg2, %arg1 : i32, i32
  }
  func.func @transform_2(%arg0: i32, %arg1: i32, %arg2: i32) -> (i32, i32) {
    %c0_i32 = arith.constant 0 : i32
    %c0_i32_0 = arith.constant 0 : i32
    return %c0_i32, %arg1 : i32, i32
  }
  func.func @transform_3(%arg0: i32, %arg1: i32, %arg2: i32) -> (i32, i32) {
    %c0_i32 = arith.constant 0 : i32
    return %arg0, %arg1 : i32, i32
  }
}

</mosaic_0001>

<llo_original>
// kernel: basic_conv_forward.1
$region0: #{basic_conv_forward.1}
  #allocation0 [shape = 'u32[]', space=smem, size = 0x4, offset = 0x4, fixed_abs, tag = 'smem constant byte address 0x4 - core index']
  #allocation1 [shape = 'u32[72,128]{1,0:T(1,128)}', space=vmem, size = 0x9000, scoped, tag = 'internal scratch']
  #allocation2 [shape = 'f32[256,128]{1,0:T(8,128)}', space=vmem, size = 0x20000, scoped, tag = 'scratch operand']
  %s0 = inlined_call_operand.vmem [shape: bf16[512,36], index: 0, kind: input, shape index: {}]
  %s1 = inlined_call_operand.vmem [shape: bf16[36,128], index: 1, kind: input, shape index: {}]
  %s2 = inlined_call_operand.vmem [shape: f32[1,128], index: 2, kind: input, shape index: {}]
  %s3 = inlined_call_operand.vmem [shape: f32[512,128], index: 3, kind: output, shape index: {}]
  %s4 = sld [smem:[#allocation0]]
  $region53: #{basic_conv_forward.1} parent=0
    _
  %s6 = ssub.s32 1, %s4
  %s7 = scalar_select 0, %s6, %s4
  loop: start=0, step=1, limit=4
  $region2: #{basic_conv_forward.1} parent=0 // loop_pre_header
    _
  $region3: #{basic_conv_forward.1} parent=0 // loop_header
    %s9 = sphi 0, %s13
    %p10 = scmp.ge.s32.totalorder %s9, 4
    %s16 = sphi 0, %s35
    %s17 = sphi 0, %s31
    %s18 = sphi 0, %s27
    %s19 = sphi 0, %s16
    %s20 = sphi 0, %s17
    %s21 = sphi 0, %s18
    %s22 = sphi 0, %s19
    %s23 = sphi 0, %s20
    %s24 = sphi 0, %s21
    %s40 = sphi 0, %s42
    %s43 = sphi 0, %s40
    %s44 = sphi 0, %s43
    %s60 = sphi 0, %s44
    %s68 = sphi 0, %s70
    %s71 = sphi 0, %s68
    %s72 = sphi 0, %s71
    %s88 = sphi 0, %s72
    %s94 = sphi 0, %s96
    %s97 = sphi 0, %s94
    %s98 = sphi 0, %s97
    %s114 = sphi 0, %s98
    %s122 = sphi 0, %s124
    %s125 = sphi 0, %s122
    %s126 = sphi 0, %s125
    %s142 = sphi 0, %s126
  $region4: #{basic_conv_forward.1} parent=0 // loop_header_branch
    %12 = sbr.rel (%p10) target = $region8
  $region5: #{basic_conv_forward.1} parent=0 // loop_body
    %s14 = ssub.s32 %s9, 1
    %s15 = ssub.s32 %s9, 2
    %s25 = sadd.s32 1, %s18
    %p26 = scmp.ge.s32.totalorder %s25, 1
    %s27 = scalar_select %p26, 0, %s25
    %s28 = sadd.s32 1, %s17
    %s29 = scalar_select %p26, %s28, %s17
    %p30 = scmp.ge.s32.totalorder %s29, 1
    %s31 = scalar_select %p30, 0, %s29
    %s32 = sadd.s32 1, %s16
    %s33 = scalar_select %p30, %s32, %s16
    %p34 = scmp.ge.s32.totalorder %s33, 2
    %s35 = scalar_select %p34, 0, %s33
    %s36 = ssub.s32 %s16, %s35
    %s37 = ssub.s32 %s18, %s27
    %s38 = sor.u32 %s36, %s37
    %p39 = scmp.eq.s32.totalorder %s38, 0
    %s41 = sadd.s32 %s40, 1
    %s42 = scalar_select %p39, %s40, %s41
    %p45 = pneg %p39
    %p46 = scmp.eq.s32.totalorder %s9, 1
    %p47 = por %p45, %p46
    %p48 = scmp.ne.s32.totalorder %s40, %s43
    %p49 = scmp.eq.s32.totalorder %s9, 0
    %p50 = por %p48, %p49
    %p51 = scmp.ne.s32.totalorder %s40, %s43
    %p52 = scmp.eq.s32.totalorder %s14, 1
    %p53 = por %p51, %p52
    %p54 = scmp.ne.s32.totalorder %s43, %s44
    %p55 = scmp.eq.s32.totalorder %s14, 0
    %p56 = por %p54, %p55
    %p57 = scmp.ne.s32.totalorder %s43, %s44
    %p58 = scmp.eq.s32.totalorder %s15, 1
    %p59 = por %p57, %p58
    %p61 = scmp.ne.s32.totalorder %s44, %s60
    %p62 = scmp.eq.s32.totalorder %s15, 0
    %p63 = por %p61, %p62
    %s64 = ssub.s32 %s18, %s27
    %s65 = ssub.s32 %s17, %s31
    %s66 = sor.u32 %s64, %s65
    %p67 = scmp.eq.s32.totalorder %s66, 0
    %s69 = sadd.s32 %s68, 1
    %s70 = scalar_select %p67, %s68, %s69
    %p73 = pneg %p67
    %p74 = scmp.eq.s32.totalorder %s9, 1
    %p75 = por %p73, %p74
    %p76 = scmp.ne.s32.totalorder %s68, %s71
    %p77 = scmp.eq.s32.totalorder %s9, 0
    %p78 = por %p76, %p77
    %p79 = scmp.ne.s32.totalorder %s68, %s71
    %p80 = scmp.eq.s32.totalorder %s14, 1
    %p81 = por %p79, %p80
    %p82 = scmp.ne.s32.totalorder %s71, %s72
    %p83 = scmp.eq.s32.totalorder %s14, 0
    %p84 = por %p82, %p83
    %p85 = scmp.ne.s32.totalorder %s71, %s72
    %p86 = scmp.eq.s32.totalorder %s15, 1
    %p87 = por %p85, %p86
    %p89 = scmp.ne.s32.totalorder %s72, %s88
    %p90 = scmp.eq.s32.totalorder %s15, 0
    %p91 = por %p89, %p90
    %s92 = ssub.s32 %s17, %s31
    %p93 = scmp.eq.s32.totalorder %s92, 0
    %s95 = sadd.s32 %s94, 1
    %s96 = scalar_select %p93, %s94, %s95
    %p99 = pneg %p93
    %p100 = scmp.eq.s32.totalorder %s9, 1
    %p101 = por %p99, %p100
    %p102 = scmp.ne.s32.totalorder %s94, %s97
    %p103 = scmp.eq.s32.totalorder %s9, 0
    %p104 = por %p102, %p103
    %p105 = scmp.ne.s32.totalorder %s94, %s97
    %p106 = scmp.eq.s32.totalorder %s14, 1
    %p107 = por %p105, %p106
    %p108 = scmp.ne.s32.totalorder %s97, %s98
    %p109 = scmp.eq.s32.totalorder %s14, 0
    %p110 = por %p108, %p109
    %p111 = scmp.ne.s32.totalorder %s97, %s98
    %p112 = scmp.eq.s32.totalorder %s15, 1
    %p113 = por %p111, %p112
    %p115 = scmp.ne.s32.totalorder %s98, %s114
    %p116 = scmp.eq.s32.totalorder %s15, 0
    %p117 = por %p115, %p116
    %s118 = ssub.s32 %s16, %s35
    %s119 = ssub.s32 %s17, %s31
    %s120 = sor.u32 %s118, %s119
    %p121 = scmp.eq.s32.totalorder %s120, 0
    %s123 = sadd.s32 %s122, 1
    %s124 = scalar_select %p121, %s122, %s123
    %p127 = pneg %p121
    %p128 = scmp.eq.s32.totalorder %s9, 1
    %p129 = por %p127, %p128
    %p130 = scmp.ne.s32.totalorder %s122, %s125
    %p131 = scmp.eq.s32.totalorder %s9, 0
    %p132 = por %p130, %p131
    %p133 = scmp.ne.s32.totalorder %s122, %s125
    %p134 = scmp.eq.s32.totalorder %s14, 1
    %p135 = por %p133, %p134
    %p136 = scmp.ne.s32.totalorder %s125, %s126
    %p137 = scmp.eq.s32.totalorder %s14, 0
    %p138 = por %p136, %p137
    %p139 = scmp.ne.s32.totalorder %s125, %s126
    %p140 = scmp.eq.s32.totalorder %s15, 1
    %p141 = por %p139, %p140
    %p143 = scmp.ne.s32.totalorder %s126, %s142
    %p144 = scmp.eq.s32.totalorder %s15, 0
    %p145 = por %p143, %p144
    %p146 = scmp.le.s32.totalorder 1, %s9
    %p147 = scmp.lt.s32.totalorder %s9, 3
    %p148 = pnand %p146, %p147
    %p149 = pneg %p148
    // Predicated region
    $region9: #{basic_conv_forward.1} parent=5 // pred_check
      _
    $region10: #{basic_conv_forward.1} parent=5 // pred_check_branch
      %151 = sbr.rel (%p148) target = $region12
    $region11: #{basic_conv_forward.1} parent=5 // pred_region
      %s152 = ssub.s32 %s9, 1
      // Predicated region
      $region13: #{basic_conv_forward.1} parent=11 // pred_check
        %p153 = pneg %p84
      $region14: #{basic_conv_forward.1} parent=11 // pred_check_branch
        %155 = sbr.rel (%p153) target = $region16
      $region15: #{basic_conv_forward.1} parent=11 // pred_region
        %s156 = smul.u32 5, %s21
        %p157 = scmp.lt.s32.totalorder %s156, 4
        %s158 = scalar_select %p157, %s156, 4
        %p159 = scmp.lt.s32.totalorder %s20, 0
        %s160 = scalar_select %p159, %s20, 0
        %s161 = sadd.s32 %s160, %s158
        %s162 = smul.addr %s161, 4
        %s163 = scalar_lea.vmem %s1, %s162
        %s164 = smul.u32 5, %s21
      $region16: #{basic_conv_forward.1} parent=11 // pred_fallthru
        _
      // Predicated region
      $region17: #{basic_conv_forward.1} parent=11 // pred_check
        %p165 = pneg %p110
      $region18: #{basic_conv_forward.1} parent=11 // pred_check_branch
        %167 = sbr.rel (%p165) target = $region20
      $region19: #{basic_conv_forward.1} parent=11 // pred_region
        %p168 = scmp.lt.s32.totalorder %s20, 0
        %s169 = scalar_select %p168, %s20, 0
        %s170 = scalar_lea.vmem %s2, %s169
      $region20: #{basic_conv_forward.1} parent=11 // pred_fallthru
        _
    $region12: #{basic_conv_forward.1} parent=5 // pred_fallthru
      _
    %p171 = scmp.lt.s32.totalorder %s9, 2
    // Predicated region
    $region21: #{basic_conv_forward.1} parent=5 // pred_check
      %p172 = pneg %p171
    $region22: #{basic_conv_forward.1} parent=5 // pred_check_branch
      %174 = sbr.rel (%p172) target = $region24
    $region23: #{basic_conv_forward.1} parent=5 // pred_region
      // Predicated region
      $region25: #{basic_conv_forward.1} parent=23 // pred_check
        %p175 = pneg %p50
      $region26: #{basic_conv_forward.1} parent=23 // pred_check_branch
        %177 = sbr.rel (%p175) target = $region28
      $region27: #{basic_conv_forward.1} parent=23 // pred_region
        %s178 = smul.u32 32, %s16
        %p179 = scmp.lt.s32.totalorder %s178, 63
        %s180 = scalar_select %p179, %s178, 63
        %p181 = scmp.lt.s32.totalorder %s18, 0
        %s182 = scalar_select %p181, %s18, 0
        %s183 = sadd.s32 %s182, %s180
        %s184 = smul.addr %s183, 4
        %s185 = scalar_lea.vmem %s0, %s184
        %s186 = smul.u32 32, %s16
      $region28: #{basic_conv_forward.1} parent=23 // pred_fallthru
        _
    $region24: #{basic_conv_forward.1} parent=5 // pred_fallthru
      _
    %p187 = scmp.le.s32.totalorder 1, %s9
    %p188 = scmp.lt.s32.totalorder %s9, 3
    %p189 = pnand %p187, %p188
    %p190 = pneg %p189
    // Predicated region
    $region29: #{basic_conv_forward.1} parent=5 // pred_check
      _
    $region30: #{basic_conv_forward.1} parent=5 // pred_check_branch
      %192 = sbr.rel (%p189) target = $region32
    $region31: #{basic_conv_forward.1} parent=5 // pred_region
      %s193 = ssub.s32 %s9, 1
      %s194 = smul.u32 32, %s19
      %p195 = scmp.lt.s32.totalorder %s194, 63
      %s196 = scalar_select %p195, %s194, 63
      %p197 = scmp.lt.s32.totalorder %s21, 0
      %s198 = scalar_select %p197, %s21, 0
      %s199 = sadd.s32 %s198, %s196
      %s200 = smul.addr %s199, 4
      %s201 = scalar_lea.vmem %s0, %s200
      %p202 = pneg %p56
      %p203 = pneg %p53
      %s204 = smul.u32 5, %s21
      %p205 = scmp.lt.s32.totalorder %s204, 4
      %s206 = scalar_select %p205, %s204, 4
      %p207 = scmp.lt.s32.totalorder %s20, 0
      %s208 = scalar_select %p207, %s20, 0
      %s209 = sadd.s32 %s208, %s206
      %s210 = smul.addr %s209, 4
      %s211 = scalar_lea.vmem %s1, %s210
      %p212 = pneg %p84
      %p213 = pneg %p81
      %p214 = scmp.lt.s32.totalorder %s20, 0
      %s215 = scalar_select %p214, %s20, 0
      %s216 = scalar_lea.vmem %s2, %s215
      %p217 = pneg %p110
      %p218 = pneg %p107
      %p219 = pneg %p138
      %p220 = pneg %p135
      %s221 = smul.u32 32, %s19
      %p222 = scmp.lt.s32.totalorder %s221, 63
      %s223 = scalar_select %p222, %s221, 63
      %p224 = scmp.lt.s32.totalorder %s20, 0
      %s225 = scalar_select %p224, %s20, 0
      %s226 = sadd.s32 %s225, %s223
      %s227 = smul.addr %s226, 8
      %s228 = scalar_lea.vmem %s3, %s227
      %s229 = smul.u32 32, %s19
      %p230 = scmp.lt.s32.totalorder %s229, 63
      %s231 = scalar_select %p230, %s229, 63
      %p232 = scmp.lt.s32.totalorder %s21, 0
      %s233 = scalar_select %p232, %s21, 0
      %s234 = sadd.s32 %s233, %s231
      %s235 = smul.addr %s234, 4
      %s236 = scalar_lea.vmem %s0, %s235
      %s237 = smul.u32 32, %s19
      %s238 = smul.u32 5, %s21
      %p239 = scmp.lt.s32.totalorder %s238, 4
      %s240 = scalar_select %p239, %s238, 4
      %p241 = scmp.lt.s32.totalorder %s20, 0
      %s242 = scalar_select %p241, %s20, 0
      %s243 = sadd.s32 %s242, %s240
      %s244 = smul.addr %s243, 4
      %s245 = scalar_lea.vmem %s1, %s244
      %s246 = smul.u32 5, %s21
      %p247 = scmp.lt.s32.totalorder %s20, 0
      %s248 = scalar_select %p247, %s20, 0
      %s249 = scalar_lea.vmem %s2, %s248
      %s250 = smul.u32 32, %s19
      %p251 = scmp.lt.s32.totalorder %s250, 63
      %s252 = scalar_select %p251, %s250, 63
      %p253 = scmp.lt.s32.totalorder %s20, 0
      %s254 = scalar_select %p253, %s20, 0
      %s255 = sadd.s32 %s254, %s252
      %s256 = smul.addr %s255, 8
      %s257 = scalar_lea.vmem %s3, %s256
      %s258 = smul.u32 32, %s19
      %p260 = scmp.eq.s32.totalorder %s21, 0
      // Predicated region
      $region33: #{basic_conv_forward.1} parent=31 // pred_check
        %p261 = pneg %p260
      $region34: #{basic_conv_forward.1} parent=31 // pred_check_branch
        %263 = sbr.rel (%p261) target = $region36
      $region35: #{basic_conv_forward.1} parent=31 // pred_region
        %264 = vst [vmem:[#allocation2] sm:$0xff] 0.0
        %265 = vst [vmem:[#allocation2 + $0x8] sm:$0xff] 0.0
        %266 = vst [vmem:[#allocation2 + $0x10] sm:$0xff] 0.0
        %267 = vst [vmem:[#allocation2 + $0x18] sm:$0xff] 0.0
        %268 = vst [vmem:[#allocation2 + $0x20] sm:$0xff] 0.0
        %269 = vst [vmem:[#allocation2 + $0x28] sm:$0xff] 0.0
        %270 = vst [vmem:[#allocation2 + $0x30] sm:$0xff] 0.0
        %271 = vst [vmem:[#allocation2 + $0x38] sm:$0xff] 0.0
        %272 = vst [vmem:[#allocation2 + $0x40] sm:$0xff] 0.0
        %273 = vst [vmem:[#allocation2 + $0x48] sm:$0xff] 0.0
        %274 = vst [vmem:[#allocation2 + $0x50] sm:$0xff] 0.0
        %275 = vst [vmem:[#allocation2 + $0x58] sm:$0xff] 0.0
        %276 = vst [vmem:[#allocation2 + $0x60] sm:$0xff] 0.0
        %277 = vst [vmem:[#allocation2 + $0x68] sm:$0xff] 0.0
        %278 = vst [vmem:[#allocation2 + $0x70] sm:$0xff] 0.0
        %279 = vst [vmem:[#allocation2 + $0x78] sm:$0xff] 0.0
        %280 = vst [vmem:[#allocation2 + $0x80] sm:$0xff] 0.0
        %281 = vst [vmem:[#allocation2 + $0x88] sm:$0xff] 0.0
        %282 = vst [vmem:[#allocation2 + $0x90] sm:$0xff] 0.0
        %283 = vst [vmem:[#allocation2 + $0x98] sm:$0xff] 0.0
        %284 = vst [vmem:[#allocation2 + $0xa0] sm:$0xff] 0.0
        %285 = vst [vmem:[#allocation2 + $0xa8] sm:$0xff] 0.0
        %286 = vst [vmem:[#allocation2 + $0xb0] sm:$0xff] 0.0
        %287 = vst [vmem:[#allocation2 + $0xb8] sm:$0xff] 0.0
        %288 = vst [vmem:[#allocation2 + $0xc0] sm:$0xff] 0.0
        %289 = vst [vmem:[#allocation2 + $0xc8] sm:$0xff] 0.0
        %290 = vst [vmem:[#allocation2 + $0xd0] sm:$0xff] 0.0
        %291 = vst [vmem:[#allocation2 + $0xd8] sm:$0xff] 0.0
        %292 = vst [vmem:[#allocation2 + $0xe0] sm:$0xff] 0.0
        %293 = vst [vmem:[#allocation2 + $0xe8] sm:$0xff] 0.0
        %294 = vst [vmem:[#allocation2 + $0xf0] sm:$0xff] 0.0
        %295 = vst [vmem:[#allocation2 + $0xf8] sm:$0xff] 0.0
      $region36: #{basic_conv_forward.1} parent=31 // pred_fallthru
        _
      %v296 = vld [vmem:[#allocation2] sm:$0xff]
      %v297 = vld [vmem:[#allocation2 + $0x8] sm:$0xff]
      %v298 = vld [vmem:[#allocation2 + $0x10] sm:$0xff]
      %v299 = vld [vmem:[#allocation2 + $0x18] sm:$0xff]
      %v300 = vld [vmem:[#allocation2 + $0x20] sm:$0xff]
      %v301 = vld [vmem:[#allocation2 + $0x28] sm:$0xff]
      %v302 = vld [vmem:[#allocation2 + $0x30] sm:$0xff]
      %v303 = vld [vmem:[#allocation2 + $0x38] sm:$0xff]
      %v304 = vld [vmem:[#allocation2 + $0x40] sm:$0xff]
      %v305 = vld [vmem:[#allocation2 + $0x48] sm:$0xff]
      %v306 = vld [vmem:[#allocation2 + $0x50] sm:$0xff]
      %v307 = vld [vmem:[#allocation2 + $0x58] sm:$0xff]
      %v308 = vld [vmem:[#allocation2 + $0x60] sm:$0xff]
      %v309 = vld [vmem:[#allocation2 + $0x68] sm:$0xff]
      %v310 = vld [vmem:[#allocation2 + $0x70] sm:$0xff]
      %v311 = vld [vmem:[#allocation2 + $0x78] sm:$0xff]
      %v312 = vld [vmem:[#allocation2 + $0x80] sm:$0xff]
      %v313 = vld [vmem:[#allocation2 + $0x88] sm:$0xff]
      %v314 = vld [vmem:[#allocation2 + $0x90] sm:$0xff]
      %v315 = vld [vmem:[#allocation2 + $0x98] sm:$0xff]
      %v316 = vld [vmem:[#allocation2 + $0xa0] sm:$0xff]
      %v317 = vld [vmem:[#allocation2 + $0xa8] sm:$0xff]
      %v318 = vld [vmem:[#allocation2 + $0xb0] sm:$0xff]
      %v319 = vld [vmem:[#allocation2 + $0xb8] sm:$0xff]
      %v320 = vld [vmem:[#allocation2 + $0xc0] sm:$0xff]
      %v321 = vld [vmem:[#allocation2 + $0xc8] sm:$0xff]
      %v322 = vld [vmem:[#allocation2 + $0xd0] sm:$0xff]
      %v323 = vld [vmem:[#allocation2 + $0xd8] sm:$0xff]
      %v324 = vld [vmem:[#allocation2 + $0xe0] sm:$0xff]
      %v325 = vld [vmem:[#allocation2 + $0xe8] sm:$0xff]
      %v326 = vld [vmem:[#allocation2 + $0xf0] sm:$0xff]
      %v327 = vld [vmem:[#allocation2 + $0xf8] sm:$0xff]
      %v328 = vld [vmem:[%s236] sm:$0xf]
      %v329 = vld [vmem:[%s236 + $0x4] sm:$0xf]
      %v330 = vld [vmem:[%s236 + $0x8] sm:$0xf]
      %v331 = vld [vmem:[%s236 + $0xc] sm:$0xf]
      %v332 = vld [vmem:[%s236 + $0x10] sm:$0xf]
      %v333 = vld [vmem:[%s236 + $0x14] sm:$0xf]
      %v334 = vld [vmem:[%s236 + $0x18] sm:$0xf]
      %v335 = vld [vmem:[%s236 + $0x1c] sm:$0xf]
      %v336 = vld [vmem:[%s236 + $0x20] sm:$0xf]
      %v337 = vld [vmem:[%s236 + $0x24] sm:$0xf]
      %v338 = vld [vmem:[%s236 + $0x28] sm:$0xf]
      %v339 = vld [vmem:[%s236 + $0x2c] sm:$0xf]
      %v340 = vld [vmem:[%s236 + $0x30] sm:$0xf]
      %v341 = vld [vmem:[%s236 + $0x34] sm:$0xf]
      %v342 = vld [vmem:[%s236 + $0x38] sm:$0xf]
      %v343 = vld [vmem:[%s236 + $0x3c] sm:$0xf]
      %v344 = vld [vmem:[%s236 + $0x40] sm:$0xf]
      %v345 = vld [vmem:[%s236 + $0x44] sm:$0xf]
      %v346 = vld [vmem:[%s236 + $0x48] sm:$0xf]
      %v347 = vld [vmem:[%s236 + $0x4c] sm:$0xf]
      %v348 = vld [vmem:[%s236 + $0x50] sm:$0xf]
      %v349 = vld [vmem:[%s236 + $0x54] sm:$0xf]
      %v350 = vld [vmem:[%s236 + $0x58] sm:$0xf]
      %v351 = vld [vmem:[%s236 + $0x5c] sm:$0xf]
      %v352 = vld [vmem:[%s236 + $0x60] sm:$0xf]
      %v353 = vld [vmem:[%s236 + $0x64] sm:$0xf]
      %v354 = vld [vmem:[%s236 + $0x68] sm:$0xf]
      %v355 = vld [vmem:[%s236 + $0x6c] sm:$0xf]
      %v356 = vld [vmem:[%s236 + $0x70] sm:$0xf]
      %v357 = vld [vmem:[%s236 + $0x74] sm:$0xf]
      %v358 = vld [vmem:[%s236 + $0x78] sm:$0xf]
      %v359 = vld [vmem:[%s236 + $0x7c] sm:$0xf]
      %v360 = vld [vmem:[%s245] sm:$0xf]
      %v361 = vld [vmem:[%s245 + $0x4] sm:$0xf]
      %v362 = vld [vmem:[%s245 + $0x8] sm:$0xf]
      %v363 = vld [vmem:[%s245 + $0xc] sm:$0xf]
      %v364 = vld [vmem:[%s245 + $0x10] sm:$0x3]
      %v397 = vunpack.c.l.b16 %v328
      %v398 = vunpack.c.l.b16 %v329
      %v399 = vunpack.c.l.b16 %v330
      %v400 = vunpack.c.l.b16 %v331
      %v401 = vunpack.c.l.b16 %v332
      %v402 = vunpack.c.l.b16 %v333
      %v403 = vunpack.c.l.b16 %v334
      %v404 = vunpack.c.l.b16 %v335
      %v405 = vunpack.c.l.b16 %v336
      %v406 = vunpack.c.l.b16 %v337
      %v407 = vunpack.c.l.b16 %v338
      %v408 = vunpack.c.l.b16 %v339
      %v409 = vunpack.c.l.b16 %v340
      %v410 = vunpack.c.l.b16 %v341
      %v411 = vunpack.c.l.b16 %v342
      %v412 = vunpack.c.l.b16 %v343
      %v413 = vunpack.c.l.b16 %v344
      %v414 = vunpack.c.l.b16 %v345
      %v415 = vunpack.c.l.b16 %v346
      %v416 = vunpack.c.l.b16 %v347
      %v417 = vunpack.c.l.b16 %v348
      %v418 = vunpack.c.l.b16 %v349
      %v419 = vunpack.c.l.b16 %v350
      %v420 = vunpack.c.l.b16 %v351
      %v421 = vunpack.c.l.b16 %v352
      %v422 = vunpack.c.l.b16 %v353
      %v423 = vunpack.c.l.b16 %v354
      %v424 = vunpack.c.l.b16 %v355
      %v425 = vunpack.c.l.b16 %v356
      %v426 = vunpack.c.l.b16 %v357
      %v427 = vunpack.c.l.b16 %v358
      %v428 = vunpack.c.l.b16 %v359
      %v429 = vpack.c.b16 %v398, %v397
      %v430 = vpack.c.b16 %v400, %v399
      %v431 = vpack.c.b16 %v402, %v401
      %v432 = vpack.c.b16 %v404, %v403
      %v433 = vpack.c.b16 %v406, %v405
      %v434 = vpack.c.b16 %v408, %v407
      %v435 = vpack.c.b16 %v410, %v409
      %v436 = vpack.c.b16 %v412, %v411
      %v437 = vpack.c.b16 %v414, %v413
      %v438 = vpack.c.b16 %v416, %v415
      %v439 = vpack.c.b16 %v418, %v417
      %v440 = vpack.c.b16 %v420, %v419
      %v441 = vpack.c.b16 %v422, %v421
      %v442 = vpack.c.b16 %v424, %v423
      %v443 = vpack.c.b16 %v426, %v425
      %v444 = vpack.c.b16 %v428, %v427
      %v450 = vunpack.c.l.b16 %v360
      %v451 = vunpack.c.l.b16 %v361
      %v452 = vunpack.c.l.b16 %v362
      %v453 = vunpack.c.l.b16 %v363
      %v454 = vunpack.c.l.b16 %v364
      %v455 = vpack.c.b16 %v451, %v450
      %v456 = vpack.c.b16 %v453, %v452
      %v457 = vpack.c.b16 %v454, %v454
      %vm460 = vcmask 293888
      %v462 = vsel %vm460, %v429, 0
      %v465 = vsel %vm460, %v430, 0
      %v468 = vsel %vm460, %v431, 0
      %v471 = vsel %vm460, %v432, 0
      %v474 = vsel %vm460, %v433, 0
      %v477 = vsel %vm460, %v434, 0
      %v480 = vsel %vm460, %v435, 0
      %v483 = vsel %vm460, %v436, 0
      %v486 = vsel %vm460, %v437, 0
      %v489 = vsel %vm460, %v438, 0
      %v492 = vsel %vm460, %v439, 0
      %v495 = vsel %vm460, %v440, 0
      %v498 = vsel %vm460, %v441, 0
      %v501 = vsel %vm460, %v442, 0
      %v504 = vsel %vm460, %v443, 0
      %v507 = vsel %vm460, %v444, 0
      %vm509 = vcmask 1041408
      %v511 = vsel %vm509, %v457, 0
      %513 = vmatpush.bf16.msra.mxu0 0
      %514 = vmatpush.bf16.msra.mxu0 0
      %515 = vmatpush.bf16.msra.mxu0 0
      %516 = vmatpush.bf16.msra.mxu0 0
      %517 = vmatpush.bf16.msra.mxu0 0
      %518 = vmatpush.bf16.msra.mxu0 %v511
      %519 = vmatpush.bf16.msra.mxu0 %v456
      %520 = vmatpush.bf16.msra.mxu0 %v455
      %521 = vmatmul.bf16.gmra.mxu0 %v462
      %v522 = vpop.f32.mrf.mxu0
      %v523 = vadd.f32 0.0, %v522
      %v524 = vpop.f32.mrf.mxu0
      %v525 = vadd.f32 0.0, %v524
      %526 = vmatmul.bf16.gmra.mxu0 %v465
      %v527 = vpop.f32.mrf.mxu0
      %v528 = vadd.f32 0.0, %v527
      %v529 = vpop.f32.mrf.mxu0
      %v530 = vadd.f32 0.0, %v529
      %531 = vmatmul.bf16.gmra.mxu0 %v468
      %v532 = vpop.f32.mrf.mxu0
      %v533 = vadd.f32 0.0, %v532
      %v534 = vpop.f32.mrf.mxu0
      %v535 = vadd.f32 0.0, %v534
      %536 = vmatmul.bf16.gmra.mxu0 %v471
      %v537 = vpop.f32.mrf.mxu0
      %v538 = vadd.f32 0.0, %v537
      %v539 = vpop.f32.mrf.mxu0
      %v540 = vadd.f32 0.0, %v539
      %541 = vmatmul.bf16.gmra.mxu0 %v474
      %v542 = vpop.f32.mrf.mxu0
      %v543 = vadd.f32 0.0, %v542
      %v544 = vpop.f32.mrf.mxu0
      %v545 = vadd.f32 0.0, %v544
      %546 = vmatmul.bf16.gmra.mxu0 %v477
      %v547 = vpop.f32.mrf.mxu0
      %v548 = vadd.f32 0.0, %v547
      %v549 = vpop.f32.mrf.mxu0
      %v550 = vadd.f32 0.0, %v549
      %551 = vmatmul.bf16.gmra.mxu0 %v480
      %v552 = vpop.f32.mrf.mxu0
      %v553 = vadd.f32 0.0, %v552
      %v554 = vpop.f32.mrf.mxu0
      %v555 = vadd.f32 0.0, %v554
      %556 = vmatmul.bf16.gmra.mxu0 %v483
      %v557 = vpop.f32.mrf.mxu0
      %v558 = vadd.f32 0.0, %v557
      %v559 = vpop.f32.mrf.mxu0
      %v560 = vadd.f32 0.0, %v559
      %561 = vmatmul.bf16.gmra.mxu0 %v486
      %v562 = vpop.f32.mrf.mxu0
      %v563 = vadd.f32 0.0, %v562
      %v564 = vpop.f32.mrf.mxu0
      %v565 = vadd.f32 0.0, %v564
      %566 = vmatmul.bf16.gmra.mxu0 %v489
      %v567 = vpop.f32.mrf.mxu0
      %v568 = vadd.f32 0.0, %v567
      %v569 = vpop.f32.mrf.mxu0
      %v570 = vadd.f32 0.0, %v569
      %571 = vmatmul.bf16.gmra.mxu0 %v492
      %v572 = vpop.f32.mrf.mxu0
      %v573 = vadd.f32 0.0, %v572
      %v574 = vpop.f32.mrf.mxu0
      %v575 = vadd.f32 0.0, %v574
      %576 = vmatmul.bf16.gmra.mxu0 %v495
      %v577 = vpop.f32.mrf.mxu0
      %v578 = vadd.f32 0.0, %v577
      %v579 = vpop.f32.mrf.mxu0
      %v580 = vadd.f32 0.0, %v579
      %581 = vmatmul.bf16.gmra.mxu0 %v498
      %v582 = vpop.f32.mrf.mxu0
      %v583 = vadd.f32 0.0, %v582
      %v584 = vpop.f32.mrf.mxu0
      %v585 = vadd.f32 0.0, %v584
      %586 = vmatmul.bf16.gmra.mxu0 %v501
      %v587 = vpop.f32.mrf.mxu0
      %v588 = vadd.f32 0.0, %v587
      %v589 = vpop.f32.mrf.mxu0
      %v590 = vadd.f32 0.0, %v589
      %591 = vmatmul.bf16.gmra.mxu0 %v504
      %v592 = vpop.f32.mrf.mxu0
      %v593 = vadd.f32 0.0, %v592
      %v594 = vpop.f32.mrf.mxu0
      %v595 = vadd.f32 0.0, %v594
      %596 = vmatmul.bf16.gmra.mxu0 %v507
      %v597 = vpop.f32.mrf.mxu0
      %v598 = vadd.f32 0.0, %v597
      %v599 = vpop.f32.mrf.mxu0
      %v600 = vadd.f32 0.0, %v599
      %601 = vdwg.mxu0
      %v602 = vadd.f32 %v296, %v523
      %v603 = vadd.f32 %v297, %v525
      %v604 = vadd.f32 %v298, %v528
      %v605 = vadd.f32 %v299, %v530
      %v606 = vadd.f32 %v300, %v533
      %v607 = vadd.f32 %v301, %v535
      %v608 = vadd.f32 %v302, %v538
      %v609 = vadd.f32 %v303, %v540
      %v610 = vadd.f32 %v304, %v543
      %v611 = vadd.f32 %v305, %v545
      %v612 = vadd.f32 %v306, %v548
      %v613 = vadd.f32 %v307, %v550
      %v614 = vadd.f32 %v308, %v553
      %v615 = vadd.f32 %v309, %v555
      %v616 = vadd.f32 %v310, %v558
      %v617 = vadd.f32 %v311, %v560
      %v618 = vadd.f32 %v312, %v563
      %v619 = vadd.f32 %v313, %v565
      %v620 = vadd.f32 %v314, %v568
      %v621 = vadd.f32 %v315, %v570
      %v622 = vadd.f32 %v316, %v573
      %v623 = vadd.f32 %v317, %v575
      %v624 = vadd.f32 %v318, %v578
      %v625 = vadd.f32 %v319, %v580
      %v626 = vadd.f32 %v320, %v583
      %v627 = vadd.f32 %v321, %v585
      %v628 = vadd.f32 %v322, %v588
      %v629 = vadd.f32 %v323, %v590
      %v630 = vadd.f32 %v324, %v593
      %v631 = vadd.f32 %v325, %v595
      %v632 = vadd.f32 %v326, %v598
      %v633 = vadd.f32 %v327, %v600
      %634 = vst [vmem:[#allocation2] sm:$0xff] %v602
      %635 = vst [vmem:[#allocation2 + $0x8] sm:$0xff] %v603
      %636 = vst [vmem:[#allocation2 + $0x10] sm:$0xff] %v604
      %637 = vst [vmem:[#allocation2 + $0x18] sm:$0xff] %v605
      %638 = vst [vmem:[#allocation2 + $0x20] sm:$0xff] %v606
      %639 = vst [vmem:[#allocation2 + $0x28] sm:$0xff] %v607
      %640 = vst [vmem:[#allocation2 + $0x30] sm:$0xff] %v608
      %641 = vst [vmem:[#allocation2 + $0x38] sm:$0xff] %v609
      %642 = vst [vmem:[#allocation2 + $0x40] sm:$0xff] %v610
      %643 = vst [vmem:[#allocation2 + $0x48] sm:$0xff] %v611
      %644 = vst [vmem:[#allocation2 + $0x50] sm:$0xff] %v612
      %645 = vst [vmem:[#allocation2 + $0x58] sm:$0xff] %v613
      %646 = vst [vmem:[#allocation2 + $0x60] sm:$0xff] %v614
      %647 = vst [vmem:[#allocation2 + $0x68] sm:$0xff] %v615
      %648 = vst [vmem:[#allocation2 + $0x70] sm:$0xff] %v616
      %649 = vst [vmem:[#allocation2 + $0x78] sm:$0xff] %v617
      %650 = vst [vmem:[#allocation2 + $0x80] sm:$0xff] %v618
      %651 = vst [vmem:[#allocation2 + $0x88] sm:$0xff] %v619
      %652 = vst [vmem:[#allocation2 + $0x90] sm:$0xff] %v620
      %653 = vst [vmem:[#allocation2 + $0x98] sm:$0xff] %v621
      %654 = vst [vmem:[#allocation2 + $0xa0] sm:$0xff] %v622
      %655 = vst [vmem:[#allocation2 + $0xa8] sm:$0xff] %v623
      %656 = vst [vmem:[#allocation2 + $0xb0] sm:$0xff] %v624
      %657 = vst [vmem:[#allocation2 + $0xb8] sm:$0xff] %v625
      %658 = vst [vmem:[#allocation2 + $0xc0] sm:$0xff] %v626
      %659 = vst [vmem:[#allocation2 + $0xc8] sm:$0xff] %v627
      %660 = vst [vmem:[#allocation2 + $0xd0] sm:$0xff] %v628
      %661 = vst [vmem:[#allocation2 + $0xd8] sm:$0xff] %v629
      %662 = vst [vmem:[#allocation2 + $0xe0] sm:$0xff] %v630
      %663 = vst [vmem:[#allocation2 + $0xe8] sm:$0xff] %v631
      %664 = vst [vmem:[#allocation2 + $0xf0] sm:$0xff] %v632
      %665 = vst [vmem:[#allocation2 + $0xf8] sm:$0xff] %v633
      // Predicated region
      $region37: #{basic_conv_forward.1} parent=31 // pred_check
        %p666 = pneg %p260
      $region38: #{basic_conv_forward.1} parent=31 // pred_check_branch
        %668 = sbr.rel (%p666) target = $region40
      $region39: #{basic_conv_forward.1} parent=31 // pred_region
        %v669 = vld [vmem:[#allocation2] sm:$0xff]
        %v670 = vld [vmem:[#allocation2 + $0x8] sm:$0xff]
        %v671 = vld [vmem:[#allocation2 + $0x10] sm:$0xff]
        %v672 = vld [vmem:[#allocation2 + $0x18] sm:$0xff]
        %v673 = vld [vmem:[#allocation2 + $0x20] sm:$0xff]
        %v674 = vld [vmem:[#allocation2 + $0x28] sm:$0xff]
        %v675 = vld [vmem:[#allocation2 + $0x30] sm:$0xff]
        %v676 = vld [vmem:[#allocation2 + $0x38] sm:$0xff]
        %v677 = vld [vmem:[#allocation2 + $0x40] sm:$0xff]
        %v678 = vld [vmem:[#allocation2 + $0x48] sm:$0xff]
        %v679 = vld [vmem:[#allocation2 + $0x50] sm:$0xff]
        %v680 = vld [vmem:[#allocation2 + $0x58] sm:$0xff]
        %v681 = vld [vmem:[#allocation2 + $0x60] sm:$0xff]
        %v682 = vld [vmem:[#allocation2 + $0x68] sm:$0xff]
        %v683 = vld [vmem:[#allocation2 + $0x70] sm:$0xff]
        %v684 = vld [vmem:[#allocation2 + $0x78] sm:$0xff]
        %v685 = vld [vmem:[#allocation2 + $0x80] sm:$0xff]
        %v686 = vld [vmem:[#allocation2 + $0x88] sm:$0xff]
        %v687 = vld [vmem:[#allocation2 + $0x90] sm:$0xff]
        %v688 = vld [vmem:[#allocation2 + $0x98] sm:$0xff]
        %v689 = vld [vmem:[#allocation2 + $0xa0] sm:$0xff]
        %v690 = vld [vmem:[#allocation2 + $0xa8] sm:$0xff]
        %v691 = vld [vmem:[#allocation2 + $0xb0] sm:$0xff]
        %v692 = vld [vmem:[#allocation2 + $0xb8] sm:$0xff]
        %v693 = vld [vmem:[#allocation2 + $0xc0] sm:$0xff]
        %v694 = vld [vmem:[#allocation2 + $0xc8] sm:$0xff]
        %v695 = vld [vmem:[#allocation2 + $0xd0] sm:$0xff]
        %v696 = vld [vmem:[#allocation2 + $0xd8] sm:$0xff]
        %v697 = vld [vmem:[#allocation2 + $0xe0] sm:$0xff]
        %v698 = vld [vmem:[#allocation2 + $0xe8] sm:$0xff]
        %v699 = vld [vmem:[#allocation2 + $0xf0] sm:$0xff]
        %v700 = vld [vmem:[#allocation2 + $0xf8] sm:$0xff]
        %v701 = vld [vmem:[%s249] sm:$0x1]
        %v703 = vperm.slane %v701, 0
        %v705 = vadd.f32 %v669, %v703
        %v706 = vadd.f32 %v670, %v703
        %v707 = vadd.f32 %v671, %v703
        %v708 = vadd.f32 %v672, %v703
        %v709 = vadd.f32 %v673, %v703
        %v710 = vadd.f32 %v674, %v703
        %v711 = vadd.f32 %v675, %v703
        %v712 = vadd.f32 %v676, %v703
        %v713 = vadd.f32 %v677, %v703
        %v714 = vadd.f32 %v678, %v703
        %v715 = vadd.f32 %v679, %v703
        %v716 = vadd.f32 %v680, %v703
        %v717 = vadd.f32 %v681, %v703
        %v718 = vadd.f32 %v682, %v703
        %v719 = vadd.f32 %v683, %v703
        %v720 = vadd.f32 %v684, %v703
        %v721 = vadd.f32 %v685, %v703
        %v722 = vadd.f32 %v686, %v703
        %v723 = vadd.f32 %v687, %v703
        %v724 = vadd.f32 %v688, %v703
        %v725 = vadd.f32 %v689, %v703
        %v726 = vadd.f32 %v690, %v703
        %v727 = vadd.f32 %v691, %v703
        %v728 = vadd.f32 %v692, %v703
        %v729 = vadd.f32 %v693, %v703
        %v730 = vadd.f32 %v694, %v703
        %v731 = vadd.f32 %v695, %v703
        %v732 = vadd.f32 %v696, %v703
        %v733 = vadd.f32 %v697, %v703
        %v734 = vadd.f32 %v698, %v703
        %v735 = vadd.f32 %v699, %v703
        %v736 = vadd.f32 %v700, %v703
        %v737 = vmax.f32 %v705, 0.0
        %v738 = vmax.f32 %v706, 0.0
        %v739 = vmax.f32 %v707, 0.0
        %v740 = vmax.f32 %v708, 0.0
        %v741 = vmax.f32 %v709, 0.0
        %v742 = vmax.f32 %v710, 0.0
        %v743 = vmax.f32 %v711, 0.0
        %v744 = vmax.f32 %v712, 0.0
        %v745 = vmax.f32 %v713, 0.0
        %v746 = vmax.f32 %v714, 0.0
        %v747 = vmax.f32 %v715, 0.0
        %v748 = vmax.f32 %v716, 0.0
        %v749 = vmax.f32 %v717, 0.0
        %v750 = vmax.f32 %v718, 0.0
        %v751 = vmax.f32 %v719, 0.0
        %v752 = vmax.f32 %v720, 0.0
        %v753 = vmax.f32 %v721, 0.0
        %v754 = vmax.f32 %v722, 0.0
        %v755 = vmax.f32 %v723, 0.0
        %v756 = vmax.f32 %v724, 0.0
        %v757 = vmax.f32 %v725, 0.0
        %v758 = vmax.f32 %v726, 0.0
        %v759 = vmax.f32 %v727, 0.0
        %v760 = vmax.f32 %v728, 0.0
        %v761 = vmax.f32 %v729, 0.0
        %v762 = vmax.f32 %v730, 0.0
        %v763 = vmax.f32 %v731, 0.0
        %v764 = vmax.f32 %v732, 0.0
        %v765 = vmax.f32 %v733, 0.0
        %v766 = vmax.f32 %v734, 0.0
        %v767 = vmax.f32 %v735, 0.0
        %v768 = vmax.f32 %v736, 0.0
        %769 = vst [vmem:[%s257] sm:$0xff] %v737
        %770 = vst [vmem:[%s257 + $0x8] sm:$0xff] %v738
        %771 = vst [vmem:[%s257 + $0x10] sm:$0xff] %v739
        %772 = vst [vmem:[%s257 + $0x18] sm:$0xff] %v740
        %773 = vst [vmem:[%s257 + $0x20] sm:$0xff] %v741
        %774 = vst [vmem:[%s257 + $0x28] sm:$0xff] %v742
        %775 = vst [vmem:[%s257 + $0x30] sm:$0xff] %v743
        %776 = vst [vmem:[%s257 + $0x38] sm:$0xff] %v744
        %777 = vst [vmem:[%s257 + $0x40] sm:$0xff] %v745
        %778 = vst [vmem:[%s257 + $0x48] sm:$0xff] %v746
        %779 = vst [vmem:[%s257 + $0x50] sm:$0xff] %v747
        %780 = vst [vmem:[%s257 + $0x58] sm:$0xff] %v748
        %781 = vst [vmem:[%s257 + $0x60] sm:$0xff] %v749
        %782 = vst [vmem:[%s257 + $0x68] sm:$0xff] %v750
        %783 = vst [vmem:[%s257 + $0x70] sm:$0xff] %v751
        %784 = vst [vmem:[%s257 + $0x78] sm:$0xff] %v752
        %785 = vst [vmem:[%s257 + $0x80] sm:$0xff] %v753
        %786 = vst [vmem:[%s257 + $0x88] sm:$0xff] %v754
        %787 = vst [vmem:[%s257 + $0x90] sm:$0xff] %v755
        %788 = vst [vmem:[%s257 + $0x98] sm:$0xff] %v756
        %789 = vst [vmem:[%s257 + $0xa0] sm:$0xff] %v757
        %790 = vst [vmem:[%s257 + $0xa8] sm:$0xff] %v758
        %791 = vst [vmem:[%s257 + $0xb0] sm:$0xff] %v759
        %792 = vst [vmem:[%s257 + $0xb8] sm:$0xff] %v760
        %793 = vst [vmem:[%s257 + $0xc0] sm:$0xff] %v761
        %794 = vst [vmem:[%s257 + $0xc8] sm:$0xff] %v762
        %795 = vst [vmem:[%s257 + $0xd0] sm:$0xff] %v763
        %796 = vst [vmem:[%s257 + $0xd8] sm:$0xff] %v764
        %797 = vst [vmem:[%s257 + $0xe0] sm:$0xff] %v765
        %798 = vst [vmem:[%s257 + $0xe8] sm:$0xff] %v766
        %799 = vst [vmem:[%s257 + $0xf0] sm:$0xff] %v767
        %800 = vst [vmem:[%s257 + $0xf8] sm:$0xff] %v768
      $region40: #{basic_conv_forward.1} parent=31 // pred_fallthru
        _
      %s801 = smul.u32 32, %s19
      %p802 = scmp.lt.s32.totalorder %s801, 63
      %s803 = scalar_select %p802, %s801, 63
      %p804 = scmp.lt.s32.totalorder %s20, 0
      %s805 = scalar_select %p804, %s20, 0
      %s806 = sadd.s32 %s805, %s803
      %s807 = smul.addr %s806, 8
      %s808 = scalar_lea.vmem %s3, %s807
      // Predicated region
      $region41: #{basic_conv_forward.1} parent=31 // pred_check
        %p809 = pneg %p135
      $region42: #{basic_conv_forward.1} parent=31 // pred_check_branch
        %811 = sbr.rel (%p809) target = $region44
      $region43: #{basic_conv_forward.1} parent=31 // pred_region
        %s812 = smul.u32 32, %s19
      $region44: #{basic_conv_forward.1} parent=31 // pred_fallthru
        _
    $region32: #{basic_conv_forward.1} parent=5 // pred_fallthru
      _
    %p813 = scmp.le.s32.totalorder 2, %s9
    // Predicated region
    $region45: #{basic_conv_forward.1} parent=5 // pred_check
      %p814 = pneg %p813
    $region46: #{basic_conv_forward.1} parent=5 // pred_check_branch
      %816 = sbr.rel (%p814) target = $region48
    $region47: #{basic_conv_forward.1} parent=5 // pred_region
      %s817 = ssub.s32 %s9, 2
      // Predicated region
      $region49: #{basic_conv_forward.1} parent=47 // pred_check
        %p818 = pneg %p141
      $region50: #{basic_conv_forward.1} parent=47 // pred_check_branch
        %820 = sbr.rel (%p818) target = $region52
      $region51: #{basic_conv_forward.1} parent=47 // pred_region
        %s821 = smul.u32 32, %s22
        %p822 = scmp.lt.s32.totalorder %s821, 63
        %s823 = scalar_select %p822, %s821, 63
        %p824 = scmp.lt.s32.totalorder %s23, 0
        %s825 = scalar_select %p824, %s23, 0
        %s826 = sadd.s32 %s825, %s823
        %s827 = smul.addr %s826, 8
        %s828 = scalar_lea.vmem %s3, %s827
      $region52: #{basic_conv_forward.1} parent=47 // pred_fallthru
        _
    $region48: #{basic_conv_forward.1} parent=5 // pred_fallthru
      _
  $region6: #{basic_conv_forward.1} parent=0 // loop_footer
    %s13 = sadd.s32 1, %s9
  $region7: #{basic_conv_forward.1} parent=0 // loop_footer_branch
    %8 = sbr.rel target = $region3
  $region8: #{basic_conv_forward.1} parent=0 // loop_exit
    _

</llo_original>
